<compile_context>
chip_gen: v6e
topology: v6e:2x2x1
jax: 0.10.0
libtpu: 0.0.40
codegen_flags: <defaults>
</compile_context>

<pallas_src>
import jax
import jax.numpy as jnp
from jax.experimental import pallas as pl
from jax.experimental.pallas import tpu as pltpu

LANE = 128
SUBLANE = 8


def _round_up(n, m):
    return ((n + m - 1) // m) * m


def actor_forward_kernel(x_ref, w1_ref, b1_ref, w2_ref, b2_ref, w3_ref, b3_ref,
                         out_ref):
    x = x_ref[...]

    # layer1 + tanh (MXU accumulates in f32, bias/tanh in f32)
    h1 = jnp.dot(x, w1_ref[...], preferred_element_type=jnp.float32)
    h1 = jnp.tanh(h1 + b1_ref[...])

    # layer2 + tanh
    h2 = jnp.dot(h1.astype(w2_ref.dtype), w2_ref[...],
                 preferred_element_type=jnp.float32)
    h2 = jnp.tanh(h2 + b2_ref[...])

    # layer3 (logits, no activation) -- stored at true act_dim width
    logits = jnp.dot(h2.astype(w3_ref.dtype), w3_ref[...],
                     preferred_element_type=jnp.float32)
    out_ref[...] = (logits + b3_ref[...]).astype(out_ref.dtype)
    # TODO(synk): the Categorical sampler / log_softmax of Actor.policy /
    # Actor.log_prob could be fused here so the act_dim-wide logits never
    # round-trip HBM at all (extra exp/log rides the idle EUP slot).


def prepare_params(params, *, mxu_dtype=jnp.bfloat16):
    """One-time pad + cast of weights/biases for the kernel.

    Hidden dim is zero-padded to a multiple of 128 lanes (numerically exact:
    tanh(0)=0 feeds zero-weight rows). Weights are cast to `mxu_dtype`
    (bf16 is MXU-native on v5e/v6e/v7x); biases stay float32.
    """
    w1, b1, w2, b2, w3, b3 = (params[k]
                              for k in ("w1", "b1", "w2", "b2", "w3", "b3"))
    obs_dim, h_dim = w1.shape
    act_dim = w3.shape[1]
    h_p = _round_up(h_dim, LANE)

    def pad2(a, rows, cols, dtype):
        return jnp.pad(a, ((0, rows - a.shape[0]),
                           (0, cols - a.shape[1]))).astype(dtype)

    return {
        "w1": pad2(w1, obs_dim, h_p, mxu_dtype),
        "b1": pad2(b1, 1, h_p, jnp.float32),
        "w2": pad2(w2, h_p, h_p, mxu_dtype),
        "b2": pad2(b2, 1, h_p, jnp.float32),
        "w3": pad2(w3, h_p, act_dim, mxu_dtype),
        "b3": b3.astype(jnp.float32),
    }


def actor_forward(x, prepared, *, block_b=None):
    """x: [B, obs_dim] float32; prepared: output of prepare_params()."""
    w1, b1, w2, b2, w3, b3 = (prepared[k]
                              for k in ("w1", "b1", "w2", "b2", "w3", "b3"))
    B, obs_dim = x.shape
    assert obs_dim == w1.shape[0], "obs_dim mismatch with prepared params"
    h_p = w1.shape[1]
    act_dim = w3.shape[1]
    mxu_dtype = w1.dtype

    # Sublane alignment for the batch tile: 8 rows/vreg at f32, 16 at bf16.
    align = SUBLANE * max(1, 4 // jnp.dtype(mxu_dtype).itemsize)

    if block_b is None:
        # Big tiles amortize the ~0.35us per-grid-step overhead; keep >=2
        # grid steps when possible so both v7x TensorCores get work.
        target = 2048
        if B >= 2 * target:
            block_b = target
        else:
            half = _round_up(pl.cdiv(B, 2), align)
            block_b = half if B > align else _round_up(max(B, 1), align)
    block_b = _round_up(max(block_b, align), align)
    B_p = _round_up(B, block_b)
    grid = (B_p // block_b,)

    # x at its true width; only batch rows padded (zero rows are harmless).
    x_p = x.astype(mxu_dtype)
    if B_p != B:
        x_p = jnp.pad(x_p, ((0, B_p - B), (0, 0)))

    # Blocked over batch for x / out; weights & biases VMEM-resident
    # (constant block index across the whole grid -> no re-DMA).
    x_spec = pl.BlockSpec((block_b, obs_dim), lambda i: (i, 0))
    out_spec = pl.BlockSpec((block_b, act_dim), lambda i: (i, 0))
    resident = lambda a: pl.BlockSpec(a.shape, lambda i: (0, 0))

    nbytes = lambda a: a.size * a.dtype.itemsize
    cost = pl.CostEstimate(
        flops=2 * B_p * (obs_dim * h_p + h_p * h_p + h_p * act_dim),
        transcendentals=2 * B_p * h_p,
        bytes_accessed=(nbytes(x_p)
                        + sum(nbytes(a) for a in (w1, b1, w2, b2, w3, b3))
                        + B_p * act_dim * 4),
    )

    out = pl.pallas_call(
        actor_forward_kernel,
        out_shape=jax.ShapeDtypeStruct((B_p, act_dim), jnp.float32),
        grid=grid,
        in_specs=[x_spec,
                  resident(w1), resident(b1),
                  resident(w2), resident(b2),
                  resident(w3), resident(b3)],
        out_specs=out_spec,
        compiler_params=pltpu.CompilerParams(
            dimension_semantics=("parallel",)),
        cost_estimate=cost,
    )(x_p, w1, b1, w2, b2, w3, b3)

    return out[:B] if B_p != B else out


def init_actor_params(key, obs_dim, act_dim, h_dim):
    """Deterministic init mimicking nn.Linear default U(-1/sqrt(fan_in), ...)."""
    ks = jax.random.split(key, 6)

    def linear(kw, kb, fan_in, fan_out):
        bound = 1.0 / jnp.sqrt(jnp.float32(fan_in))
        w = jax.random.uniform(kw, (fan_in, fan_out), jnp.float32,
                               minval=-bound, maxval=bound)
        b = jax.random.uniform(kb, (1, fan_out), jnp.float32,
                               minval=-bound, maxval=bound)
        return w, b

    w1, b1 = linear(ks[0], ks[1], obs_dim, h_dim)
    w2, b2 = linear(ks[2], ks[3], h_dim, h_dim)
    w3, b3 = linear(ks[4], ks[5], h_dim, act_dim)
    return {"w1": w1, "b1": b1, "w2": w2, "b2": b2, "w3": w3, "b3": b3}


if __name__ == "__main__":
    obs_dim, act_dim, h_dim = 16, 4, 32

    key = jax.random.PRNGKey(0)
    k_params, k_x1, k_x2 = jax.random.split(key, 3)
    params = init_actor_params(k_params, obs_dim, act_dim, h_dim)

    def ref_forward(x):
        h = jnp.tanh(x @ params["w1"] + params["b1"])
        h = jnp.tanh(h @ params["w2"] + params["b2"])
        return h @ params["w3"] + params["b3"]

    # ---- float32 MXU path: tight tolerance ----
    prep_f32 = prepare_params(params, mxu_dtype=jnp.float32)

    x1 = jax.random.normal(k_x1, (8, obs_dim), jnp.float32)
    out1 = actor_forward(x1, prep_f32)
    jax.block_until_ready(out1)
    assert out1.shape == (8, act_dim)
    assert jnp.allclose(out1, ref_forward(x1), atol=1e-4, rtol=1e-4)

    # Ragged batch exercising the batch grid (>=2 steps) + row-pad slice.
    x2 = jax.random.normal(k_x2, (200, obs_dim), jnp.float32)
    out2 = actor_forward(x2, prep_f32, block_b=64)
    jax.block_until_ready(out2)
    assert out2.shape == (200, act_dim)
    assert jnp.allclose(out2, ref_forward(x2), atol=1e-4, rtol=1e-4)

    # ---- bf16 MXU-operand path (default; perf mode): looser tolerance ----
    prep_bf16 = prepare_params(params)  # mxu_dtype=bfloat16
    out3 = actor_forward(x2, prep_bf16)  # default block_b -> 2 grid steps
    jax.block_until_ready(out3)
    assert out3.shape == (200, act_dim)
    assert jnp.allclose(out3, ref_forward(x2), atol=1e-1, rtol=5e-2)

    print("KERNEL_OK")
</pallas_src>

<mosaic_0001>
module attributes {stable_mosaic.version = 11 : i64} {
  func.func @actor_forward_kernel(%arg0: i32, %arg1: memref<8x16xf32, #tpu.memory_space<vmem>>, %arg2: memref<16x128xf32, #tpu.memory_space<vmem>>, %arg3: memref<1x128xf32, #tpu.memory_space<vmem>>, %arg4: memref<128x128xf32, #tpu.memory_space<vmem>>, %arg5: memref<1x128xf32, #tpu.memory_space<vmem>>, %arg6: memref<128x4xf32, #tpu.memory_space<vmem>>, %arg7: memref<1x4xf32, #tpu.memory_space<vmem>>, %arg8: memref<8x4xf32, #tpu.memory_space<vmem>>) attributes {dimension_semantics = [#tpu.dimension_semantics<parallel>], iteration_bounds = array<i64: 1>, scalar_prefetch = 0 : i64, scratch_operands = 0 : i64, tpu.core_type = #tpu.core_type<tc>, window_params = [{transform_indices = @transform_0, window_bounds = array<i64: 8, 16>}, {pipeline_mode = #tpu.pipeline_mode<synchronous>, transform_indices = @transform_1, window_bounds = array<i64: 16, 128>}, {pipeline_mode = #tpu.pipeline_mode<synchronous>, transform_indices = @transform_2, window_bounds = array<i64: 1, 128>}, {pipeline_mode = #tpu.pipeline_mode<synchronous>, transform_indices = @transform_3, window_bounds = array<i64: 128, 128>}, {pipeline_mode = #tpu.pipeline_mode<synchronous>, transform_indices = @transform_4, window_bounds = array<i64: 1, 128>}, {pipeline_mode = #tpu.pipeline_mode<synchronous>, transform_indices = @transform_5, window_bounds = array<i64: 128, 4>}, {pipeline_mode = #tpu.pipeline_mode<synchronous>, transform_indices = @transform_6, window_bounds = array<i64: 1, 4>}, {transform_indices = @transform_7, window_bounds = array<i64: 8, 4>}]} {
    %c0 = arith.constant 0 : index
    %c0_0 = arith.constant 0 : index
    %0 = vector.load %arg1[%c0, %c0_0] : memref<8x16xf32, #tpu.memory_space<vmem>>, vector<8x16xf32>
    %c0_1 = arith.constant 0 : index
    %c0_2 = arith.constant 0 : index
    %1 = vector.load %arg2[%c0_1, %c0_2] : memref<16x128xf32, #tpu.memory_space<vmem>>, vector<16x128xf32>
    %cst = arith.constant dense<0.000000e+00> : vector<8x128xf32>
    %2 = tpu.matmul %0, %1, %cst {dimension_numbers = #tpu.dot_dimension_numbers<[1], [0], [0], [1], [0, 0, 1, 1], [], []>} : vector<8x16xf32>, vector<16x128xf32>, vector<8x128xf32> -> vector<8x128xf32>
    %c0_3 = arith.constant 0 : index
    %c0_4 = arith.constant 0 : index
    %3 = vector.load %arg3[%c0_3, %c0_4] : memref<1x128xf32, #tpu.memory_space<vmem>>, vector<1x128xf32>
    %4 = vector.broadcast %3 : vector<1x128xf32> to vector<8x128xf32>
    %5 = arith.addf %2, %4 : vector<8x128xf32>
    %6 = math.tanh %5 : vector<8x128xf32>
    %c0_5 = arith.constant 0 : index
    %c0_6 = arith.constant 0 : index
    %7 = vector.load %arg4[%c0_5, %c0_6] : memref<128x128xf32, #tpu.memory_space<vmem>>, vector<128x128xf32>
    %cst_7 = arith.constant dense<0.000000e+00> : vector<8x128xf32>
    %8 = tpu.matmul %6, %7, %cst_7 {dimension_numbers = #tpu.dot_dimension_numbers<[1], [0], [0], [1], [0, 0, 1, 1], [], []>} : vector<8x128xf32>, vector<128x128xf32>, vector<8x128xf32> -> vector<8x128xf32>
    %c0_8 = arith.constant 0 : index
    %c0_9 = arith.constant 0 : index
    %9 = vector.load %arg5[%c0_8, %c0_9] : memref<1x128xf32, #tpu.memory_space<vmem>>, vector<1x128xf32>
    %10 = vector.broadcast %9 : vector<1x128xf32> to vector<8x128xf32>
    %11 = arith.addf %8, %10 : vector<8x128xf32>
    %12 = math.tanh %11 : vector<8x128xf32>
    %c0_10 = arith.constant 0 : index
    %c0_11 = arith.constant 0 : index
    %13 = vector.load %arg6[%c0_10, %c0_11] : memref<128x4xf32, #tpu.memory_space<vmem>>, vector<128x4xf32>
    %cst_12 = arith.constant dense<0.000000e+00> : vector<8x4xf32>
    %14 = tpu.matmul %12, %13, %cst_12 {dimension_numbers = #tpu.dot_dimension_numbers<[1], [0], [0], [1], [0, 0, 1, 1], [], []>} : vector<8x128xf32>, vector<128x4xf32>, vector<8x4xf32> -> vector<8x4xf32>
    %c0_13 = arith.constant 0 : index
    %c0_14 = arith.constant 0 : index
    %15 = vector.load %arg7[%c0_13, %c0_14] : memref<1x4xf32, #tpu.memory_space<vmem>>, vector<1x4xf32>
    %16 = vector.broadcast %15 : vector<1x4xf32> to vector<8x4xf32>
    %17 = arith.addf %14, %16 : vector<8x4xf32>
    %c0_15 = arith.constant 0 : index
    %c0_16 = arith.constant 0 : index
    %18 = vector.load %arg8[%c0_15, %c0_16] : memref<8x4xf32, #tpu.memory_space<vmem>>, vector<8x4xf32>
    tpu.vector_store %arg8[%c0_15, %c0_16], %17 {strides = array<i32>} : memref<8x4xf32, #tpu.memory_space<vmem>>, vector<8x4xf32>,
    return
  }
  func.func @transform_0(%arg0: i32) -> (i32, i32) {
    %c0_i32 = arith.constant 0 : i32
    %c0_i32_0 = arith.constant 0 : i32
    return %arg0, %c0_i32 : i32, i32
  }
  func.func @transform_1(%arg0: i32) -> (i32, i32) {
    %c0_i32 = arith.constant 0 : i32
    %c0_i32_0 = arith.constant 0 : i32
    %c0_i32_1 = arith.constant 0 : i32
    return %c0_i32, %c0_i32_0 : i32, i32
  }
  func.func @transform_2(%arg0: i32) -> (i32, i32) {
    %c0_i32 = arith.constant 0 : i32
    %c0_i32_0 = arith.constant 0 : i32
    %c0_i32_1 = arith.constant 0 : i32
    return %c0_i32, %c0_i32_0 : i32, i32
  }
  func.func @transform_3(%arg0: i32) -> (i32, i32) {
    %c0_i32 = arith.constant 0 : i32
    %c0_i32_0 = arith.constant 0 : i32
    %c0_i32_1 = arith.constant 0 : i32
    return %c0_i32, %c0_i32_0 : i32, i32
  }
  func.func @transform_4(%arg0: i32) -> (i32, i32) {
    %c0_i32 = arith.constant 0 : i32
    %c0_i32_0 = arith.constant 0 : i32
    %c0_i32_1 = arith.constant 0 : i32
    return %c0_i32, %c0_i32_0 : i32, i32
  }
  func.func @transform_5(%arg0: i32) -> (i32, i32) {
    %c0_i32 = arith.constant 0 : i32
    %c0_i32_0 = arith.constant 0 : i32
    %c0_i32_1 = arith.constant 0 : i32
    return %c0_i32, %c0_i32_0 : i32, i32
  }
  func.func @transform_6(%arg0: i32) -> (i32, i32) {
    %c0_i32 = arith.constant 0 : i32
    %c0_i32_0 = arith.constant 0 : i32
    %c0_i32_1 = arith.constant 0 : i32
    return %c0_i32, %c0_i32_0 : i32, i32
  }
  func.func @transform_7(%arg0: i32) -> (i32, i32) {
    %c0_i32 = arith.constant 0 : i32
    %c0_i32_0 = arith.constant 0 : i32
    return %arg0, %c0_i32 : i32, i32
  }
}

</mosaic_0001>

<llo_original>
// kernel: tpu_custom_call.1
$region0: #{tpu_custom_call.1}
  #allocation0 [shape = 'u32[]', space=smem, size = 0x4, offset = 0x4, fixed_abs, tag = 'smem constant byte address 0x4 - core index']
  #allocation1 [shape = 'u32[144,128]{1,0:T(1,128)}', space=vmem, size = 0x12000, scoped, tag = 'internal scratch']
  %s0 = inlined_call_operand.vmem [shape: f32[8,16], index: 0, kind: input, shape index: {}]
  %s1 = inlined_call_operand.hbm [shape: f32[16,128], index: 1, kind: input, shape index: {}]
  %s2 = inlined_call_operand.vmem [shape: f32[1,128], index: 2, kind: input, shape index: {}]
  %s3 = inlined_call_operand.vmem [shape: f32[128,128], index: 3, kind: input, shape index: {}]
  %s4 = inlined_call_operand.hbm [shape: f32[1,128], index: 4, kind: input, shape index: {}]
  %s5 = inlined_call_operand.vmem [shape: f32[128,4], index: 5, kind: input, shape index: {}]
  %s6 = inlined_call_operand.vmem [shape: f32[1,4], index: 6, kind: input, shape index: {}]
  %s7 = inlined_call_operand.vmem [shape: f32[8,4], index: 7, kind: output, shape index: {}]
  %s8 = sld [smem:[#allocation0]]
  $region46: #{tpu_custom_call.1} parent=0
    _
  %s10 = ssub.s32 1, %s8
  %s11 = scalar_select 0, %s10, %s8
  $region1: #{tpu_custom_call.1} parent=0
    #allocation2 [shape = 'u8[8192]{0}', space=vmem, size = 0x2000, scoped, tag = 'input window, operand 1, single buffered']
    #allocation3 [shape = 's32[1]{0}', space=sflag, size = 0x4, scoped, tag = 'scoped memory for tpu_custom_call.1']
    #allocation4 [shape = 'u8[512]{0}', space=vmem, size = 0x400, scoped, tag = 'input window, operand 4, single buffered']
    #allocation5 [shape = 's32[1]{0}', space=sflag, size = 0x4, scoped, tag = 'scoped memory for tpu_custom_call.1']
    %12 = vsyncpa [#allocation3], 0
    %13 = vsyncpa [#allocation5], 0
    // Predicated region
    $region2: #{tpu_custom_call.1} parent=1 // pred_check
      _
    $region3: #{tpu_custom_call.1} parent=1 // pred_check_branch
      %15 = sbr.rel (0) target = $region5
    $region4: #{tpu_custom_call.1} parent=1 // pred_region
      _
    $region5: #{tpu_custom_call.1} parent=1 // pred_fallthru
      _
    // Predicated region
    $region6: #{tpu_custom_call.1} parent=1 // pred_check
      _
    $region7: #{tpu_custom_call.1} parent=1 // pred_check_branch
      %17 = sbr.rel (0) target = $region9
    $region8: #{tpu_custom_call.1} parent=1 // pred_region
      %s19 = ssub.s32 256, 256
      %20 = vsyncadd [#allocation3], %s19
      %s21 = sshll.u32 [#allocation2], 4
      %s22 = int_to_ptr.vmem [resolvable:$true] %s21
      %27 = dma.hbm_to_vmem [thread:$0]  %s1, 256, %s22, [#allocation3], 128, 128, 8
    $region9: #{tpu_custom_call.1} parent=1 // pred_fallthru
      _
    // Predicated region
    $region10: #{tpu_custom_call.1} parent=1 // pred_check
      _
    $region11: #{tpu_custom_call.1} parent=1 // pred_check_branch
      %29 = sbr.rel (0) target = $region13
    $region12: #{tpu_custom_call.1} parent=1 // pred_region
      _
    $region13: #{tpu_custom_call.1} parent=1 // pred_fallthru
      _
    // Predicated region
    $region14: #{tpu_custom_call.1} parent=1 // pred_check
      _
    $region15: #{tpu_custom_call.1} parent=1 // pred_check_branch
      %31 = sbr.rel (0) target = $region17
    $region16: #{tpu_custom_call.1} parent=1 // pred_region
      _
    $region17: #{tpu_custom_call.1} parent=1 // pred_fallthru
      _
    // Predicated region
    $region18: #{tpu_custom_call.1} parent=1 // pred_check
      _
    $region19: #{tpu_custom_call.1} parent=1 // pred_check_branch
      %33 = sbr.rel (0) target = $region21
    $region20: #{tpu_custom_call.1} parent=1 // pred_region
      %s35 = ssub.s32 16, 16
      %36 = vsyncadd [#allocation5], %s35
      %s38 = sshll.u32 [#allocation4], 4
      %s39 = int_to_ptr.vmem [resolvable:$true] %s38
      %41 = dma.hbm_to_vmem [thread:$0]  %s4, 16, %s39, [#allocation5]
    $region21: #{tpu_custom_call.1} parent=1 // pred_fallthru
      _
    // Predicated region
    $region22: #{tpu_custom_call.1} parent=1 // pred_check
      _
    $region23: #{tpu_custom_call.1} parent=1 // pred_check_branch
      %43 = sbr.rel (0) target = $region25
    $region24: #{tpu_custom_call.1} parent=1 // pred_region
      _
    $region25: #{tpu_custom_call.1} parent=1 // pred_fallthru
      _
    // Predicated region
    $region26: #{tpu_custom_call.1} parent=1 // pred_check
      _
    $region27: #{tpu_custom_call.1} parent=1 // pred_check_branch
      %45 = sbr.rel (0) target = $region29
    $region28: #{tpu_custom_call.1} parent=1 // pred_region
      _
    $region29: #{tpu_custom_call.1} parent=1 // pred_fallthru
      _
    // Predicated region
    $region30: #{tpu_custom_call.1} parent=1 // pred_check
      _
    $region31: #{tpu_custom_call.1} parent=1 // pred_check_branch
      %47 = sbr.rel (0) target = $region33
    $region32: #{tpu_custom_call.1} parent=1 // pred_region
      %48 = dma.done [#allocation3], 256
    $region33: #{tpu_custom_call.1} parent=1 // pred_fallthru
      _
    // Predicated region
    $region34: #{tpu_custom_call.1} parent=1 // pred_check
      _
    $region35: #{tpu_custom_call.1} parent=1 // pred_check_branch
      %50 = sbr.rel (0) target = $region37
    $region36: #{tpu_custom_call.1} parent=1 // pred_region
      %51 = dma.done [#allocation5], 16
    $region37: #{tpu_custom_call.1} parent=1 // pred_fallthru
      _
    %v52 = vld [vmem:[%s0] sm:$0xff]
    %v53 = vld [vmem:[#allocation2] sm:$0xff]
    %v54 = vld [vmem:[#allocation2 + $0x8] sm:$0xff]
    %v55 = vld [vmem:[%s2] sm:$0x1]
    %v57 = vlaneseq
    %v58 = vshrl.u32 %v57, 7
    %v59 = vsub.s32 0, %v58
    %v60 = vrot.slane %v55, %v59
    %vm62 = vcmask 130048
    %v64 = vsel %vm62, %v52, 0
    %66 = vmatprep.subr.mxu0 0.0
    %67 = vmatpush1.msra.mxu0 0.0
    %68 = vmatprep.subr.mxu0 0.0
    %69 = vmatpush1.msra.mxu0 0.0
    %70 = vmatprep.subr.mxu0 0.0
    %71 = vmatpush1.msra.mxu0 0.0
    %72 = vmatprep.subr.mxu0 0.0
    %73 = vmatpush1.msra.mxu0 0.0
    %74 = vmatprep.subr.mxu0 0.0
    %75 = vmatpush1.msra.mxu0 0.0
    %76 = vmatprep.subr.mxu0 0.0
    %77 = vmatpush1.msra.mxu0 0.0
    %78 = vmatprep.subr.mxu0 0.0
    %79 = vmatpush1.msra.mxu0 0.0
    %80 = vmatprep.subr.mxu0 0.0
    %81 = vmatpush1.msra.mxu0 0.0
    %82 = vmatprep.subr.mxu0 0.0
    %83 = vmatpush1.msra.mxu0 0.0
    %84 = vmatprep.subr.mxu0 0.0
    %85 = vmatpush1.msra.mxu0 0.0
    %86 = vmatprep.subr.mxu0 0.0
    %87 = vmatpush1.msra.mxu0 0.0
    %88 = vmatprep.subr.mxu0 0.0
    %89 = vmatpush1.msra.mxu0 0.0
    %90 = vmatprep.subr.mxu0 0.0
    %91 = vmatpush1.msra.mxu0 0.0
    %92 = vmatprep.subr.mxu0 0.0
    %93 = vmatpush1.msra.mxu0 0.0
    %94 = vmatprep.subr.mxu0 0.0
    %95 = vmatpush1.msra.mxu0 %v54
    %96 = vmatprep.subr.mxu0 0.0
    %97 = vmatpush1.msra.mxu0 %v53
    %98 = vmatprep.subr.mxu0 0.0
    %99 = vmatpush2.msra.mxu0 0.0
    %100 = vmatprep.subr.mxu0 0.0
    %101 = vmatpush2.msra.mxu0 0.0
    %102 = vmatprep.subr.mxu0 0.0
    %103 = vmatpush2.msra.mxu0 0.0
    %104 = vmatprep.subr.mxu0 0.0
    %105 = vmatpush2.msra.mxu0 0.0
    %106 = vmatprep.subr.mxu0 0.0
    %107 = vmatpush2.msra.mxu0 0.0
    %108 = vmatprep.subr.mxu0 0.0
    %109 = vmatpush2.msra.mxu0 0.0
    %110 = vmatprep.subr.mxu0 0.0
    %111 = vmatpush2.msra.mxu0 0.0
    %112 = vmatprep.subr.mxu0 0.0
    %113 = vmatpush2.msra.mxu0 0.0
    %114 = vmatprep.subr.mxu0 0.0
    %115 = vmatpush2.msra.mxu0 0.0
    %116 = vmatprep.subr.mxu0 0.0
    %117 = vmatpush2.msra.mxu0 0.0
    %118 = vmatprep.subr.mxu0 0.0
    %119 = vmatpush2.msra.mxu0 0.0
    %120 = vmatprep.subr.mxu0 0.0
    %121 = vmatpush2.msra.mxu0 0.0
    %122 = vmatprep.subr.mxu0 0.0
    %123 = vmatpush2.msra.mxu0 0.0
    %124 = vmatprep.subr.mxu0 0.0
    %125 = vmatpush2.msra.mxu0 0.0
    %126 = vmatprep.subr.mxu0 0.0
    %127 = vmatpush2.msra.mxu0 0.0
    %128 = vmatprep.subr.mxu0 0.0
    %129 = vmatpush2.msra.mxu0 0.0
    %130 = vmatprep.mubr.f32.mxu0 0.0
    %131 = vmatmul.mubr.f32.gmra.mxu0 %v64
    %v132 = vpop.f32.mrf.mxu0
    %v133 = vadd.f32 %v60, %v132
    %v134 = vpop.f32.mrf.mxu0
    %135 = vdwg.mxu0
    %v136 = vtanh.pop %v133
    %v137 = vld [vmem:[%s3] sm:$0xff]
    %v138 = vld [vmem:[%s3 + $0x8] sm:$0xff]
    %v139 = vld [vmem:[%s3 + $0x10] sm:$0xff]
    %v140 = vld [vmem:[%s3 + $0x18] sm:$0xff]
    %v141 = vld [vmem:[%s3 + $0x20] sm:$0xff]
    %v142 = vld [vmem:[%s3 + $0x28] sm:$0xff]
    %v143 = vld [vmem:[%s3 + $0x30] sm:$0xff]
    %v144 = vld [vmem:[%s3 + $0x38] sm:$0xff]
    %v145 = vld [vmem:[%s3 + $0x40] sm:$0xff]
    %v146 = vld [vmem:[%s3 + $0x48] sm:$0xff]
    %v147 = vld [vmem:[%s3 + $0x50] sm:$0xff]
    %v148 = vld [vmem:[%s3 + $0x58] sm:$0xff]
    %v149 = vld [vmem:[%s3 + $0x60] sm:$0xff]
    %v150 = vld [vmem:[%s3 + $0x68] sm:$0xff]
    %v151 = vld [vmem:[%s3 + $0x70] sm:$0xff]
    %v152 = vld [vmem:[%s3 + $0x78] sm:$0xff]
    %v153 = vld [vmem:[#allocation4] sm:$0x1]
    %v155 = vlaneseq
    %v156 = vshrl.u32 %v155, 7
    %v157 = vsub.s32 0, %v156
    %v158 = vrot.slane %v153, %v157
    %160 = vmatprep.subr.mxu0 0.0
    %161 = vmatpush1.msra.mxu0 %v152
    %162 = vmatprep.subr.mxu0 0.0
    %163 = vmatpush1.msra.mxu0 %v151
    %164 = vmatprep.subr.mxu0 0.0
    %165 = vmatpush1.msra.mxu0 %v150
    %166 = vmatprep.subr.mxu0 0.0
    %167 = vmatpush1.msra.mxu0 %v149
    %168 = vmatprep.subr.mxu0 0.0
    %169 = vmatpush1.msra.mxu0 %v148
    %170 = vmatprep.subr.mxu0 0.0
    %171 = vmatpush1.msra.mxu0 %v147
    %172 = vmatprep.subr.mxu0 0.0
    %173 = vmatpush1.msra.mxu0 %v146
    %174 = vmatprep.subr.mxu0 0.0
    %175 = vmatpush1.msra.mxu0 %v145
    %176 = vmatprep.subr.mxu0 0.0
    %177 = vmatpush1.msra.mxu0 %v144
    %178 = vmatprep.subr.mxu0 0.0
    %179 = vmatpush1.msra.mxu0 %v143
    %180 = vmatprep.subr.mxu0 0.0
    %181 = vmatpush1.msra.mxu0 %v142
    %182 = vmatprep.subr.mxu0 0.0
    %183 = vmatpush1.msra.mxu0 %v141
    %184 = vmatprep.subr.mxu0 0.0
    %185 = vmatpush1.msra.mxu0 %v140
    %186 = vmatprep.subr.mxu0 0.0
    %187 = vmatpush1.msra.mxu0 %v139
    %188 = vmatprep.subr.mxu0 0.0
    %189 = vmatpush1.msra.mxu0 %v138
    %190 = vmatprep.subr.mxu0 0.0
    %191 = vmatpush1.msra.mxu0 %v137
    %192 = vmatprep.subr.mxu0 0.0
    %193 = vmatpush2.msra.mxu0 0.0
    %194 = vmatprep.subr.mxu0 0.0
    %195 = vmatpush2.msra.mxu0 0.0
    %196 = vmatprep.subr.mxu0 0.0
    %197 = vmatpush2.msra.mxu0 0.0
    %198 = vmatprep.subr.mxu0 0.0
    %199 = vmatpush2.msra.mxu0 0.0
    %200 = vmatprep.subr.mxu0 0.0
    %201 = vmatpush2.msra.mxu0 0.0
    %202 = vmatprep.subr.mxu0 0.0
    %203 = vmatpush2.msra.mxu0 0.0
    %204 = vmatprep.subr.mxu0 0.0
    %205 = vmatpush2.msra.mxu0 0.0
    %206 = vmatprep.subr.mxu0 0.0
    %207 = vmatpush2.msra.mxu0 0.0
    %208 = vmatprep.subr.mxu0 0.0
    %209 = vmatpush2.msra.mxu0 0.0
    %210 = vmatprep.subr.mxu0 0.0
    %211 = vmatpush2.msra.mxu0 0.0
    %212 = vmatprep.subr.mxu0 0.0
    %213 = vmatpush2.msra.mxu0 0.0
    %214 = vmatprep.subr.mxu0 0.0
    %215 = vmatpush2.msra.mxu0 0.0
    %216 = vmatprep.subr.mxu0 0.0
    %217 = vmatpush2.msra.mxu0 0.0
    %218 = vmatprep.subr.mxu0 0.0
    %219 = vmatpush2.msra.mxu0 0.0
    %220 = vmatprep.subr.mxu0 0.0
    %221 = vmatpush2.msra.mxu0 0.0
    %222 = vmatprep.subr.mxu0 0.0
    %223 = vmatpush2.msra.mxu0 0.0
    %224 = vmatprep.mubr.f32.mxu0 0.0
    %225 = vmatmul.mubr.f32.gmra.mxu0 %v136
    %v226 = vpop.f32.mrf.mxu0
    %v227 = vadd.f32 %v158, %v226
    %v228 = vpop.f32.mrf.mxu0
    %229 = vdwg.mxu0
    %v230 = vtanh.pop %v227
    %v231 = vld [vmem:[%s5] sm:$0xff]
    %v232 = vld [vmem:[%s5 + $0x8] sm:$0xff]
    %v233 = vld [vmem:[%s5 + $0x10] sm:$0xff]
    %v234 = vld [vmem:[%s5 + $0x18] sm:$0xff]
    %v235 = vld [vmem:[%s5 + $0x20] sm:$0xff]
    %v236 = vld [vmem:[%s5 + $0x28] sm:$0xff]
    %v237 = vld [vmem:[%s5 + $0x30] sm:$0xff]
    %v238 = vld [vmem:[%s5 + $0x38] sm:$0xff]
    %v239 = vld [vmem:[%s5 + $0x40] sm:$0xff]
    %v240 = vld [vmem:[%s5 + $0x48] sm:$0xff]
    %v241 = vld [vmem:[%s5 + $0x50] sm:$0xff]
    %v242 = vld [vmem:[%s5 + $0x58] sm:$0xff]
    %v243 = vld [vmem:[%s5 + $0x60] sm:$0xff]
    %v244 = vld [vmem:[%s5 + $0x68] sm:$0xff]
    %v245 = vld [vmem:[%s5 + $0x70] sm:$0xff]
    %v246 = vld [vmem:[%s5 + $0x78] sm:$0xff]
    %v247 = vld [vmem:[%s6] sm:$0x1]
    %v249 = vlaneseq
    %v250 = vshrl.u32 %v249, 7
    %v251 = vsub.s32 0, %v250
    %v252 = vrot.slane %v247, %v251
    %254 = vmatprep.subr.mxu0 0.0
    %255 = vmatpush1.msra.mxu0 %v246
    %256 = vmatprep.subr.mxu0 0.0
    %257 = vmatpush1.msra.mxu0 %v245
    %258 = vmatprep.subr.mxu0 0.0
    %259 = vmatpush1.msra.mxu0 %v244
    %260 = vmatprep.subr.mxu0 0.0
    %261 = vmatpush1.msra.mxu0 %v243
    %262 = vmatprep.subr.mxu0 0.0
    %263 = vmatpush1.msra.mxu0 %v242
    %264 = vmatprep.subr.mxu0 0.0
    %265 = vmatpush1.msra.mxu0 %v241
    %266 = vmatprep.subr.mxu0 0.0
    %267 = vmatpush1.msra.mxu0 %v240
    %268 = vmatprep.subr.mxu0 0.0
    %269 = vmatpush1.msra.mxu0 %v239
    %270 = vmatprep.subr.mxu0 0.0
    %271 = vmatpush1.msra.mxu0 %v238
    %272 = vmatprep.subr.mxu0 0.0
    %273 = vmatpush1.msra.mxu0 %v237
    %274 = vmatprep.subr.mxu0 0.0
    %275 = vmatpush1.msra.mxu0 %v236
    %276 = vmatprep.subr.mxu0 0.0
    %277 = vmatpush1.msra.mxu0 %v235
    %278 = vmatprep.subr.mxu0 0.0
    %279 = vmatpush1.msra.mxu0 %v234
    %280 = vmatprep.subr.mxu0 0.0
    %281 = vmatpush1.msra.mxu0 %v233
    %282 = vmatprep.subr.mxu0 0.0
    %283 = vmatpush1.msra.mxu0 %v232
    %284 = vmatprep.subr.mxu0 0.0
    %285 = vmatpush1.msra.mxu0 %v231
    %286 = vmatprep.subr.mxu0 0.0
    %287 = vmatpush2.msra.mxu0 0.0
    %288 = vmatprep.subr.mxu0 0.0
    %289 = vmatpush2.msra.mxu0 0.0
    %290 = vmatprep.subr.mxu0 0.0
    %291 = vmatpush2.msra.mxu0 0.0
    %292 = vmatprep.subr.mxu0 0.0
    %293 = vmatpush2.msra.mxu0 0.0
    %294 = vmatprep.subr.mxu0 0.0
    %295 = vmatpush2.msra.mxu0 0.0
    %296 = vmatprep.subr.mxu0 0.0
    %297 = vmatpush2.msra.mxu0 0.0
    %298 = vmatprep.subr.mxu0 0.0
    %299 = vmatpush2.msra.mxu0 0.0
    %300 = vmatprep.subr.mxu0 0.0
    %301 = vmatpush2.msra.mxu0 0.0
    %302 = vmatprep.subr.mxu0 0.0
    %303 = vmatpush2.msra.mxu0 0.0
    %304 = vmatprep.subr.mxu0 0.0
    %305 = vmatpush2.msra.mxu0 0.0
    %306 = vmatprep.subr.mxu0 0.0
    %307 = vmatpush2.msra.mxu0 0.0
    %308 = vmatprep.subr.mxu0 0.0
    %309 = vmatpush2.msra.mxu0 0.0
    %310 = vmatprep.subr.mxu0 0.0
    %311 = vmatpush2.msra.mxu0 0.0
    %312 = vmatprep.subr.mxu0 0.0
    %313 = vmatpush2.msra.mxu0 0.0
    %314 = vmatprep.subr.mxu0 0.0
    %315 = vmatpush2.msra.mxu0 0.0
    %316 = vmatprep.subr.mxu0 0.0
    %317 = vmatpush2.msra.mxu0 0.0
    %318 = vmatprep.mubr.f32.mxu0 0.0
    %319 = vmatmul.mubr.f32.gmra.mxu0 %v230
    %v320 = vpop.f32.mrf.mxu0
    %v321 = vadd.f32 %v252, %v320
    %v322 = vpop.f32.mrf.mxu0
    %323 = vdwg.mxu0
    %vm324 = vcmask 31744
    %325 = vst.msk [vmem:[%s7] sm:$0xff] %vm324, %v321
    // Predicated region
    $region38: #{tpu_custom_call.1} parent=1 // pred_check
      _
    $region39: #{tpu_custom_call.1} parent=1 // pred_check_branch
      %327 = sbr.rel (0) target = $region41
    $region40: #{tpu_custom_call.1} parent=1 // pred_region
      _
    $region41: #{tpu_custom_call.1} parent=1 // pred_fallthru
      _
    // Predicated region
    $region42: #{tpu_custom_call.1} parent=1 // pred_check
      _
    $region43: #{tpu_custom_call.1} parent=1 // pred_check_branch
      %329 = sbr.rel (0) target = $region45
    $region44: #{tpu_custom_call.1} parent=1 // pred_region
      _
    $region45: #{tpu_custom_call.1} parent=1 // pred_fallthru
      _
    %330 = vsyncpa [#allocation3], 1
    %331 = vsyncpa [#allocation5], 1

</llo_original>
